<compile_context>
chip_gen: v7x
topology: tpu7x:2x2x1
jax: 0.10.0
libtpu: 0.0.40
codegen_flags: <defaults>
</compile_context>

<pallas_src>
import functools

import jax
import jax.numpy as jnp
from jax import lax
from jax.experimental import pallas as pl
from jax.experimental.pallas import tpu as pltpu


# Below this temperature the constant-shift cosine LSE loses precision to
# cancellation in (col_sum - e_diag); use the masked row-max LSE instead.
_CONST_SHIFT_MIN_T = 0.2


def _ntxent_kernel(zjs_ref, zis_ref, out_ref, *, batch_size, temperature,
                   use_cosine, const_shift, matmul_dtype, exp_dtype):
    """zjs_ref, zis_ref: (B, D) VMEM.  out_ref: (1, 1, 1) partial for this half."""
    b = batch_size
    d = zjs_ref.shape[-1]
    inv_t = jnp.float32(1.0 / temperature)
    h = pl.program_id(0)                 # 0 -> query rows are zjs, 1 -> zis

    zjs = zjs_ref[...].astype(jnp.float32)
    zis = zis_ref[...].astype(jnp.float32)

    if use_cosine:
        # torch.nn.CosineSimilarity-style per-row normalization (eps clamp);
        # stays f32 regardless of the matmul dtype.
        def _normalize(x):
            sq = jnp.sum(x * x, axis=-1, keepdims=True)
            return x * lax.rsqrt(jnp.maximum(sq, jnp.float32(1e-16)))
        zjs = _normalize(zjs)
        zis = _normalize(zis)

    # This half's B query rows and the other half's B key rows.
    half = jnp.where(h == 0, zjs, zis)               # (B, D) f32
    other = jnp.where(h == 0, zis, zjs)              # (B, D) f32

    # Fold 1/T into the query operand (O(B*D) scale, not an O(n^2) multiply).
    half_q = (half * inv_t).astype(matmul_dtype)     # queries, pre-scaled
    half_k = half.astype(matmul_dtype)               # keys: same half
    other_k = other.astype(matmul_dtype)             # keys: other half

    # sim_*[j, k] = <key_j, query_k> / T.  Contraction over the LAST dim of
    # BOTH operands -> MXU matmul with transposed-RHS load (no XLU transpose),
    # f32 accumulation.  Columns k (this half's queries) are lane-dense; the
    # key axis j (the LSE reduction) is the cheap sublane axis.
    dn = (((1,), (1,)), ((), ()))
    sim_self = lax.dot_general(half_k, half_q, dn,
                               preferred_element_type=jnp.float32)    # (B, B)
    sim_cross = lax.dot_general(other_k, half_q, dn,
                                preferred_element_type=jnp.float32)   # (B, B)

    def _exp(x):
        # bf16 exp on the EUP where supported (v6e/v7x); f32 math afterwards.
        return jnp.exp(x.astype(exp_dtype)).astype(jnp.float32)

    if const_shift:
        # Cosine path, moderate/large T: rows are unit-norm so sim/T <= ~1/T;
        # a constant 1/T shift replaces the masked row-max reduce, and the
        # self term (diagonal of sim_self) is removed exactly afterwards.
        e_self = _exp(sim_self - inv_t)
        e_cross = _exp(sim_cross - inv_t)
        col_sum = (jnp.sum(e_self, axis=0, keepdims=True)
                   + jnp.sum(e_cross, axis=0, keepdims=True))         # (1, B)
        # Self-similarity recomputed from the same rounded operands the MXU
        # consumed; the ones-row dot keeps the result lane-dense (1, B).
        prod = half_k.astype(jnp.float32) * half_q.astype(jnp.float32)
        diag = lax.dot_general(jnp.ones((1, d), jnp.float32), prod, dn,
                               preferred_element_type=jnp.float32)    # (1, B)
        e_diag = _exp(diag - inv_t)
        off_sum = jnp.maximum(col_sum - e_diag, jnp.float32(1e-30))
        lse = inv_t + jnp.log(off_sum)                                # (1, B)
    else:
        # Dot-product similarity, or cosine at small T: masked row-max LSE.
        # Only sim_self contains the excluded self term (its diagonal), so the
        # mask is a single (B, B) identity compare — no (n, n) iota pair.
        row_id = lax.broadcasted_iota(jnp.int32, (b, b), 0)
        col_id = lax.broadcasted_iota(jnp.int32, (b, b), 1)
        self_masked = jnp.where(row_id == col_id, -jnp.inf, sim_self)
        m = jnp.maximum(jnp.max(self_masked, axis=0, keepdims=True),
                        jnp.max(sim_cross, axis=0, keepdims=True))    # (1, B)
        e_sum = (jnp.sum(_exp(self_masked - m), axis=0, keepdims=True)
                 + jnp.sum(_exp(sim_cross - m), axis=0, keepdims=True))
        lse = m + jnp.log(e_sum)                                      # (1, B)

    # The positive logit of every query row in this half is <zjs_k, zis_k>/T
    # (rows k and k+B share it), so each half contributes the same exact-f32
    # full reduce.  No (n, n) partner mask needed.
    pos_sum = jnp.sum(jnp.sum(half * other, axis=-1, keepdims=True),
                      axis=0, keepdims=True) * inv_t                  # (1, 1)
    lse_sum = jnp.sum(lse, axis=-1, keepdims=True)                    # (1, 1)
    out_ref[...] = (lse_sum - pos_sum).reshape(1, 1, 1)


def _vmem_capacity_bytes():
    """Per-chip VMEM capacity (v5e/v6e: 128 MiB, v7x: 64 MiB per TC)."""
    try:
        return int(pltpu.get_tpu_info().vmem_capacity_bytes)
    except Exception:
        return 64 * 1024 * 1024          # conservative (v7x-sized) fallback


def _default_exp_dtype(matmul_dtype):
    """bf16 exp only where the EUP supports it (v6e/v7x) and the matmul is
    already bf16 (the accepted low-precision regime)."""
    if jnp.dtype(matmul_dtype) != jnp.dtype(jnp.bfloat16):
        return jnp.float32
    try:
        kind = jax.devices()[0].device_kind.lower()
    except Exception:
        return jnp.float32
    if any(old in kind for old in ("v2", "v3", "v4", "v5")):
        return jnp.float32               # no bf16 EUP/VPU on v5e and older
    return jnp.bfloat16


def ntxent_loss(zis, zjs, *, temperature=0.5, use_cosine_similarity=True,
                matmul_dtype=jnp.bfloat16, exp_dtype=None):
    """Pallas implementation of NTXentLoss.forward (reduction='sum').

    matmul_dtype=jnp.bfloat16 (with f32 accumulation) is the performance
    default: the v5e/v6e/v7x MXUs are bf16-native and f32 matmuls are emulated
    with multiple bf16 passes (~3-6x slower).  Pass matmul_dtype=jnp.float32
    only for bit-tight validation against an f32 reference.
    """
    assert zis.shape == zjs.shape and zis.ndim == 2
    b, d = zis.shape
    n = 2 * b
    if exp_dtype is None:
        exp_dtype = _default_exp_dtype(matmul_dtype)

    use_cosine = bool(use_cosine_similarity)
    const_shift = use_cosine and float(temperature) >= _CONST_SHIFT_MIN_T

    kernel = functools.partial(
        _ntxent_kernel,
        batch_size=b,
        temperature=float(temperature),
        use_cosine=use_cosine,
        const_shift=const_shift,
        matmul_dtype=matmul_dtype,
        exp_dtype=exp_dtype,
    )

    # Branch-aware per-grid-step VMEM estimate (bytes), with slop:
    #   * (B, D) operands: zjs/zis f32 (double-buffered) + normalized copies +
    #     half/other views + three matmul-dtype casts,
    #   * (B, B) temporaries: the masked branch keeps more live (sims, iota,
    #     masked, exp blocks) than the constant-shift cosine branch.
    mm_bytes = jnp.dtype(matmul_dtype).itemsize
    exp_bytes = jnp.dtype(exp_dtype).itemsize
    n_big = 5 if const_shift else 7
    est = (10 * b * d * 4 + 3 * b * d * mm_bytes
           + b * b * (n_big * 4 + 2 * exp_bytes)
           + (2 << 20))
    cap = _vmem_capacity_bytes()
    vmem_limit = int(min(max(est, 32 * 1024 * 1024), cap - 8 * 1024 * 1024))
    # TODO(synk): when est exceeds the per-chip ceiling, switch to the
    # column-tiled online-logsumexp variant instead of relying on spills.

    out = pl.pallas_call(
        kernel,
        out_shape=jax.ShapeDtypeStruct((2, 1, 1), jnp.float32),
        grid=(2,),
        in_specs=[pl.BlockSpec((b, d), lambda h: (0, 0)),
                  pl.BlockSpec((b, d), lambda h: (0, 0))],
        out_specs=pl.BlockSpec((1, 1, 1), lambda h: (h, 0, 0)),
        compiler_params=pltpu.CompilerParams(
            dimension_semantics=("parallel",),
            vmem_limit_bytes=vmem_limit),
    )(zjs, zis)
    return jnp.sum(out) / n


def ntxent_loss_ref(zis, zjs, *, temperature=0.5, use_cosine_similarity=True):
    """Pure-JAX reference mirroring the PyTorch module (f32 throughout)."""
    rep = jnp.concatenate([zjs, zis], axis=0).astype(jnp.float32)
    if use_cosine_similarity:
        norm = jnp.sqrt(jnp.sum(rep * rep, axis=-1, keepdims=True))
        rep_n = rep / jnp.maximum(norm, 1e-8)
        sim = rep_n @ rep_n.T
    else:
        sim = rep @ rep.T
    n = rep.shape[0]
    b = n // 2
    logits = sim / temperature
    masked = jnp.where(jnp.eye(n, dtype=bool), -jnp.inf, logits)
    lse = jax.scipy.special.logsumexp(masked, axis=-1)
    partner = (jnp.arange(n) + b) % n
    pos = logits[jnp.arange(n), partner]
    return jnp.sum(lse - pos) / n


if __name__ == "__main__":
    key = jax.random.PRNGKey(0)
    k1, k2 = jax.random.split(key)
    batch_size, hidden = 8, 32
    temperature = 0.5
    zis = jax.random.normal(k1, (batch_size, hidden), dtype=jnp.float32)
    zjs = jax.random.normal(k2, (batch_size, hidden), dtype=jnp.float32)

    # Exact (f32-MXU) validation path — tight tolerance vs. the pure-JAX ref.
    for use_cos in (True, False):
        got = jax.block_until_ready(
            ntxent_loss(zis, zjs, temperature=temperature,
                        use_cosine_similarity=use_cos,
                        matmul_dtype=jnp.float32))
        ref = ntxent_loss_ref(zis, zjs, temperature=temperature,
                              use_cosine_similarity=use_cos)
        assert jnp.allclose(got, ref, rtol=1e-5, atol=1e-5), (use_cos, got, ref)

    # Low-temperature cosine run exercises the masked-LSE fallback path.
    got = jax.block_until_ready(
        ntxent_loss(zis, zjs, temperature=0.1, use_cosine_similarity=True,
                    matmul_dtype=jnp.float32))
    ref = ntxent_loss_ref(zis, zjs, temperature=0.1,
                          use_cosine_similarity=True)
    assert jnp.allclose(got, ref, rtol=1e-5, atol=1e-5), ("low-T", got, ref)

    # Default perf path: bf16 MXU (+ bf16 EUP exp on v6e/v7x) — loose tol.
    for use_cos in (True, False):
        got = jax.block_until_ready(
            ntxent_loss(zis, zjs, temperature=temperature,
                        use_cosine_similarity=use_cos))
        ref = ntxent_loss_ref(zis, zjs, temperature=temperature,
                              use_cosine_similarity=use_cos)
        assert jnp.allclose(got, ref, rtol=5e-2, atol=5e-2), (use_cos, got, ref)

    print("KERNEL_OK")
</pallas_src>

<mosaic_0001>
module attributes {stable_mosaic.version = 11 : i64} {
  func.func @_ntxent_kernel(%arg0: i32, %arg1: memref<8x32xf32, #tpu.memory_space<vmem>>, %arg2: memref<8x32xf32, #tpu.memory_space<vmem>>, %arg3: memref<1x1x1xf32, #tpu.memory_space<vmem>>) attributes {dimension_semantics = [#tpu.dimension_semantics<parallel>], iteration_bounds = array<i64: 2>, scalar_prefetch = 0 : i64, scratch_operands = 0 : i64, tpu.core_type = #tpu.core_type<tc>, window_params = [{pipeline_mode = #tpu.pipeline_mode<synchronous>, transform_indices = @transform_0, window_bounds = array<i64: 8, 32>}, {pipeline_mode = #tpu.pipeline_mode<synchronous>, transform_indices = @transform_1, window_bounds = array<i64: 8, 32>}, {transform_indices = @transform_2, window_bounds = array<i64: 1, 1, 1>}]} {
    %c0 = arith.constant 0 : index
    %c0_0 = arith.constant 0 : index
    %0 = vector.load %arg1[%c0, %c0_0] : memref<8x32xf32, #tpu.memory_space<vmem>>, vector<8x32xf32>
    %c0_1 = arith.constant 0 : index
    %c0_2 = arith.constant 0 : index
    %1 = vector.load %arg2[%c0_1, %c0_2] : memref<8x32xf32, #tpu.memory_space<vmem>>, vector<8x32xf32>
    %2 = arith.mulf %0, %0 : vector<8x32xf32>
    %cst = arith.constant dense<0.000000e+00> : vector<8xf32>
    %3 = vector.multi_reduction <add>, %2, %cst [1] : vector<8x32xf32> to vector<8xf32>
    %4 = vector.shape_cast %3 : vector<8xf32> to vector<8x1xf32>
    %cst_3 = arith.constant 1.000000e-16 : f32
    %5 = vector.broadcast %cst_3 : f32 to vector<8x1xf32>
    %6 = arith.maximumf %4, %5 : vector<8x1xf32>
    %7 = math.rsqrt %6 : vector<8x1xf32>
    %8 = vector.broadcast %7 : vector<8x1xf32> to vector<8x32xf32>
    %9 = arith.mulf %0, %8 : vector<8x32xf32>
    %10 = arith.mulf %1, %1 : vector<8x32xf32>
    %cst_4 = arith.constant dense<0.000000e+00> : vector<8xf32>
    %11 = vector.multi_reduction <add>, %10, %cst_4 [1] : vector<8x32xf32> to vector<8xf32>
    %12 = vector.shape_cast %11 : vector<8xf32> to vector<8x1xf32>
    %cst_5 = arith.constant 1.000000e-16 : f32
    %13 = vector.broadcast %cst_5 : f32 to vector<8x1xf32>
    %14 = arith.maximumf %12, %13 : vector<8x1xf32>
    %15 = math.rsqrt %14 : vector<8x1xf32>
    %16 = vector.broadcast %15 : vector<8x1xf32> to vector<8x32xf32>
    %17 = arith.mulf %1, %16 : vector<8x32xf32>
    %c0_i32 = arith.constant 0 : i32
    %18 = arith.cmpi eq, %arg0, %c0_i32 : i32
    %19 = arith.select %18, %9, %17 : vector<8x32xf32>
    %c0_i32_6 = arith.constant 0 : i32
    %20 = arith.cmpi eq, %arg0, %c0_i32_6 : i32
    %21 = arith.select %20, %17, %9 : vector<8x32xf32>
    %cst_7 = arith.constant 2.000000e+00 : f32
    %22 = vector.broadcast %cst_7 : f32 to vector<8x32xf32>
    %23 = arith.mulf %19, %22 : vector<8x32xf32>
    %cst_8 = arith.constant dense<0.000000e+00> : vector<8x8xf32>
    %24 = tpu.matmul %19, %23, %cst_8 {dimension_numbers = #tpu.dot_dimension_numbers<[1], [1], [0], [0], [0, 0, 1, 0], [], []>} : vector<8x32xf32>, vector<8x32xf32>, vector<8x8xf32> -> vector<8x8xf32>
    %cst_9 = arith.constant dense<0.000000e+00> : vector<8x8xf32>
    %25 = tpu.matmul %21, %23, %cst_9 {dimension_numbers = #tpu.dot_dimension_numbers<[1], [1], [0], [0], [0, 0, 1, 0], [], []>} : vector<8x32xf32>, vector<8x32xf32>, vector<8x8xf32> -> vector<8x8xf32>
    %cst_10 = arith.constant 2.000000e+00 : f32
    %26 = vector.broadcast %cst_10 : f32 to vector<8x8xf32>
    %27 = arith.subf %24, %26 : vector<8x8xf32>
    %28 = math.exp %27 : vector<8x8xf32>
    %cst_11 = arith.constant 2.000000e+00 : f32
    %29 = vector.broadcast %cst_11 : f32 to vector<8x8xf32>
    %30 = arith.subf %25, %29 : vector<8x8xf32>
    %31 = math.exp %30 : vector<8x8xf32>
    %cst_12 = arith.constant dense<0.000000e+00> : vector<8xf32>
    %32 = vector.multi_reduction <add>, %28, %cst_12 [0] : vector<8x8xf32> to vector<8xf32>
    %33 = vector.shape_cast %32 : vector<8xf32> to vector<1x8xf32>
    %cst_13 = arith.constant dense<0.000000e+00> : vector<8xf32>
    %34 = vector.multi_reduction <add>, %31, %cst_13 [0] : vector<8x8xf32> to vector<8xf32>
    %35 = vector.shape_cast %34 : vector<8xf32> to vector<1x8xf32>
    %36 = arith.addf %33, %35 : vector<1x8xf32>
    %37 = arith.mulf %19, %23 : vector<8x32xf32>
    %cst_14 = arith.constant 1.000000e+00 : f32
    %38 = vector.broadcast %cst_14 : f32 to vector<1x32xf32>
    %cst_15 = arith.constant dense<0.000000e+00> : vector<1x8xf32>
    %39 = tpu.matmul %38, %37, %cst_15 {dimension_numbers = #tpu.dot_dimension_numbers<[1], [1], [0], [0], [0, 0, 1, 0], [], []>} : vector<1x32xf32>, vector<8x32xf32>, vector<1x8xf32> -> vector<1x8xf32>
    %cst_16 = arith.constant 2.000000e+00 : f32
    %40 = vector.broadcast %cst_16 : f32 to vector<1x8xf32>
    %41 = arith.subf %39, %40 : vector<1x8xf32>
    %42 = math.exp %41 : vector<1x8xf32>
    %43 = arith.subf %36, %42 : vector<1x8xf32>
    %cst_17 = arith.constant 1.000000e-30 : f32
    %44 = vector.broadcast %cst_17 : f32 to vector<1x8xf32>
    %45 = arith.maximumf %43, %44 : vector<1x8xf32>
    %46 = math.log %45 : vector<1x8xf32>
    %cst_18 = arith.constant 2.000000e+00 : f32
    %47 = vector.broadcast %cst_18 : f32 to vector<1x8xf32>
    %48 = arith.addf %47, %46 : vector<1x8xf32>
    %49 = arith.mulf %19, %21 : vector<8x32xf32>
    %cst_19 = arith.constant dense<0.000000e+00> : vector<8xf32>
    %50 = vector.multi_reduction <add>, %49, %cst_19 [1] : vector<8x32xf32> to vector<8xf32>
    %51 = vector.shape_cast %50 : vector<8xf32> to vector<8x1xf32>
    %cst_20 = arith.constant dense<0.000000e+00> : vector<1xf32>
    %52 = vector.multi_reduction <add>, %51, %cst_20 [0] : vector<8x1xf32> to vector<1xf32>
    %53 = vector.shape_cast %52 : vector<1xf32> to vector<1x1xf32>
    %cst_21 = arith.constant 2.000000e+00 : f32
    %54 = vector.broadcast %cst_21 : f32 to vector<1x1xf32>
    %55 = arith.mulf %53, %54 : vector<1x1xf32>
    %cst_22 = arith.constant dense<0.000000e+00> : vector<1xf32>
    %56 = vector.multi_reduction <add>, %48, %cst_22 [1] : vector<1x8xf32> to vector<1xf32>
    %57 = vector.shape_cast %56 : vector<1xf32> to vector<1x1xf32>
    %58 = arith.subf %57, %55 : vector<1x1xf32>
    %59 = vector.shape_cast %58 : vector<1x1xf32> to vector<1x1x1xf32>
    %c0_23 = arith.constant 0 : index
    %c0_24 = arith.constant 0 : index
    %c0_25 = arith.constant 0 : index
    %60 = vector.load %arg3[%c0_23, %c0_24, %c0_25] : memref<1x1x1xf32, #tpu.memory_space<vmem>>, vector<1x1x1xf32>
    tpu.vector_store %arg3[%c0_23, %c0_24, %c0_25], %59 {strides = array<i32>} : memref<1x1x1xf32, #tpu.memory_space<vmem>>, vector<1x1x1xf32>,
    return
  }
  func.func @transform_0(%arg0: i32) -> (i32, i32) {
    %c0_i32 = arith.constant 0 : i32
    %c0_i32_0 = arith.constant 0 : i32
    %c0_i32_1 = arith.constant 0 : i32
    return %c0_i32, %c0_i32_0 : i32, i32
  }
  func.func @transform_1(%arg0: i32) -> (i32, i32) {
    %c0_i32 = arith.constant 0 : i32
    %c0_i32_0 = arith.constant 0 : i32
    %c0_i32_1 = arith.constant 0 : i32
    return %c0_i32, %c0_i32_0 : i32, i32
  }
  func.func @transform_2(%arg0: i32) -> (i32, i32, i32) {
    %c0_i32 = arith.constant 0 : i32
    %c0_i32_0 = arith.constant 0 : i32
    %c0_i32_1 = arith.constant 0 : i32
    return %arg0, %c0_i32, %c0_i32_0 : i32, i32, i32
  }
}

</mosaic_0001>

<llo_original>
// kernel: tpu_custom_call.1
$region0: #{tpu_custom_call.1}
  #allocation0 [shape = 'u32[]', space=smem, size = 0x4, offset = 0x4, fixed_abs, tag = 'smem constant byte address 0x4 - core index']
  #allocation1 [shape = 'u32[144,128]{1,0:T(1,128)}', space=vmem, size = 0x12000, scoped, tag = 'internal scratch']
  %s0 = inlined_call_operand.hbm [shape: f32[8,32], index: 0, kind: input, shape index: {}]
  %s1 = inlined_call_operand.hbm [shape: f32[8,32], index: 1, kind: input, shape index: {}]
  %s2 = inlined_call_operand.vmem [shape: f32[2,1,1], index: 2, kind: output, shape index: {}]
  %s3 = sld [smem:[#allocation0]]
  $region49: #{tpu_custom_call.1} parent=0
    _
  %s5 = ssub.s32 1, %s3
  %s6 = scalar_select 0, %s5, %s3
  $region1: #{tpu_custom_call.1} parent=0
    #allocation2 [shape = 'u8[4096]{0}', space=vmem, size = 0x1000, scoped, tag = 'input window, operand 0, single buffered']
    #allocation3 [shape = 's32[2]{0}', space=sflag, size = 0x8, scoped, tag = 'scoped memory for tpu_custom_call.1']
    #allocation4 [shape = 'u8[4096]{0}', space=vmem, size = 0x1000, scoped, tag = 'input window, operand 1, single buffered']
    #allocation5 [shape = 's32[1]{0}', space=sflag, size = 0x4, scoped, tag = 'scoped memory for tpu_custom_call.1']
    %7 = vsyncpa [#allocation3], 0
    %8 = vsyncpa [#allocation5], 0
    loop: start=0, step=1, limit=4
    $region2: #{tpu_custom_call.1} parent=1 // loop_pre_header
      _
    $region3: #{tpu_custom_call.1} parent=1 // loop_header
      %s10 = sphi 0, %s14
      %p11 = scmp.ge.s32.totalorder %s10, 4
      %s18 = sphi 0, %s18
      %s20 = sphi 0, %s18
      %s21 = sphi 0, %s20
      %s35 = sphi 0, %s21
      %s39 = sphi 0, %s39
      %s41 = sphi 0, %s39
      %s42 = sphi 0, %s41
      %s56 = sphi 0, %s42
      %s62 = sphi 0, %s64
      %s65 = sphi 0, %s62
      %s66 = sphi 0, %s65
      %s82 = sphi 0, %s66
    $region4: #{tpu_custom_call.1} parent=1 // loop_header_branch
      %13 = sbr.rel (%p11) target = $region8
    $region5: #{tpu_custom_call.1} parent=1 // loop_body
      %s15 = ssub.s32 %s10, 1
      %s16 = ssub.s32 %s10, 2
      %s17 = sadd.s32 %s10, 1
      %s19 = sadd.s32 %s18, 1
      %p22 = scmp.eq.s32.totalorder %s10, 1
      %p23 = scmp.ne.s32.totalorder %s18, %s20
      %p24 = scmp.eq.s32.totalorder %s10, 0
      %p25 = por %p23, %p24
      %p26 = scmp.ne.s32.totalorder %s18, %s20
      %p27 = scmp.eq.s32.totalorder %s15, 1
      %p28 = por %p26, %p27
      %p29 = scmp.ne.s32.totalorder %s20, %s21
      %p30 = scmp.eq.s32.totalorder %s15, 0
      %p31 = por %p29, %p30
      %p32 = scmp.ne.s32.totalorder %s20, %s21
      %p33 = scmp.eq.s32.totalorder %s16, 1
      %p34 = por %p32, %p33
      %p36 = scmp.ne.s32.totalorder %s21, %s35
      %p37 = scmp.eq.s32.totalorder %s16, 0
      %p38 = por %p36, %p37
      %s40 = sadd.s32 %s39, 1
      %p43 = scmp.eq.s32.totalorder %s10, 1
      %p44 = scmp.ne.s32.totalorder %s39, %s41
      %p45 = scmp.eq.s32.totalorder %s10, 0
      %p46 = por %p44, %p45
      %p47 = scmp.ne.s32.totalorder %s39, %s41
      %p48 = scmp.eq.s32.totalorder %s15, 1
      %p49 = por %p47, %p48
      %p50 = scmp.ne.s32.totalorder %s41, %s42
      %p51 = scmp.eq.s32.totalorder %s15, 0
      %p52 = por %p50, %p51
      %p53 = scmp.ne.s32.totalorder %s41, %s42
      %p54 = scmp.eq.s32.totalorder %s16, 1
      %p55 = por %p53, %p54
      %p57 = scmp.ne.s32.totalorder %s42, %s56
      %p58 = scmp.eq.s32.totalorder %s16, 0
      %p59 = por %p57, %p58
      %s60 = ssub.s32 %s10, %s17
      %p61 = scmp.eq.s32.totalorder %s60, 0
      %s63 = sadd.s32 %s62, 1
      %s64 = scalar_select %p61, %s62, %s63
      %p67 = pneg %p61
      %p68 = scmp.eq.s32.totalorder %s10, 1
      %p69 = por %p67, %p68
      %p70 = scmp.ne.s32.totalorder %s62, %s65
      %p71 = scmp.eq.s32.totalorder %s10, 0
      %p72 = por %p70, %p71
      %p73 = scmp.ne.s32.totalorder %s62, %s65
      %p74 = scmp.eq.s32.totalorder %s15, 1
      %p75 = por %p73, %p74
      %p76 = scmp.ne.s32.totalorder %s65, %s66
      %p77 = scmp.eq.s32.totalorder %s15, 0
      %p78 = por %p76, %p77
      %p79 = scmp.ne.s32.totalorder %s65, %s66
      %p80 = scmp.eq.s32.totalorder %s16, 1
      %p81 = por %p79, %p80
      %p83 = scmp.ne.s32.totalorder %s66, %s82
      %p84 = scmp.eq.s32.totalorder %s16, 0
      %p85 = por %p83, %p84
      %p86 = scmp.le.s32.totalorder 1, %s10
      %p87 = scmp.lt.s32.totalorder %s10, 3
      %p88 = pnand %p86, %p87
      %p89 = pneg %p88
      // Predicated region
      $region9: #{tpu_custom_call.1} parent=5 // pred_check
        _
      $region10: #{tpu_custom_call.1} parent=5 // pred_check_branch
        %91 = sbr.rel (%p88) target = $region12
      $region11: #{tpu_custom_call.1} parent=5 // pred_region
        %s92 = ssub.s32 %s10, 1
        // Predicated region
        $region13: #{tpu_custom_call.1} parent=11 // pred_check
          %p93 = pneg %p31
        $region14: #{tpu_custom_call.1} parent=11 // pred_check_branch
          %95 = sbr.rel (%p93) target = $region16
        $region15: #{tpu_custom_call.1} parent=11 // pred_region
          %s97 = ssub.s32 128, 128
          %98 = vsyncadd [#allocation3], %s97
          %s100 = sshll.u32 [#allocation2], 4
          %s101 = int_to_ptr.vmem [resolvable:$true] %s100
          %103 = dma.hbm_to_vmem [thread:$0]  %s0, 128, %s101, [#allocation3]
        $region16: #{tpu_custom_call.1} parent=11 // pred_fallthru
          _
        // Predicated region
        $region17: #{tpu_custom_call.1} parent=11 // pred_check
          %p104 = pneg %p52
        $region18: #{tpu_custom_call.1} parent=11 // pred_check_branch
          %106 = sbr.rel (%p104) target = $region20
        $region19: #{tpu_custom_call.1} parent=11 // pred_region
          %s108 = ssub.s32 128, 128
          %109 = vsyncadd [#allocation5], %s108
          %s111 = sshll.u32 [#allocation4], 4
          %s112 = int_to_ptr.vmem [resolvable:$true] %s111
          %114 = dma.hbm_to_vmem [thread:$0]  %s1, 128, %s112, [#allocation5]
        $region20: #{tpu_custom_call.1} parent=11 // pred_fallthru
          _
      $region12: #{tpu_custom_call.1} parent=5 // pred_fallthru
        _
      %p115 = scmp.lt.s32.totalorder %s10, 2
      // Predicated region
      $region21: #{tpu_custom_call.1} parent=5 // pred_check
        %p116 = pneg %p115
      $region22: #{tpu_custom_call.1} parent=5 // pred_check_branch
        %118 = sbr.rel (%p116) target = $region24
      $region23: #{tpu_custom_call.1} parent=5 // pred_region
        _
      $region24: #{tpu_custom_call.1} parent=5 // pred_fallthru
        _
      %p119 = scmp.le.s32.totalorder 1, %s10
      %p120 = scmp.lt.s32.totalorder %s10, 3
      %p121 = pnand %p119, %p120
      %p122 = pneg %p121
      // Predicated region
      $region25: #{tpu_custom_call.1} parent=5 // pred_check
        _
      $region26: #{tpu_custom_call.1} parent=5 // pred_check_branch
        %124 = sbr.rel (%p121) target = $region28
      $region27: #{tpu_custom_call.1} parent=5 // pred_region
        %s125 = ssub.s32 %s10, 1
        // Predicated region
        $region29: #{tpu_custom_call.1} parent=27 // pred_check
          %p126 = pneg %p31
        $region30: #{tpu_custom_call.1} parent=27 // pred_check_branch
          %128 = sbr.rel (%p126) target = $region32
        $region31: #{tpu_custom_call.1} parent=27 // pred_region
          %129 = dma.done [#allocation3], 128
        $region32: #{tpu_custom_call.1} parent=27 // pred_fallthru
          _
        // Predicated region
        $region33: #{tpu_custom_call.1} parent=27 // pred_check
          %p130 = pneg %p52
        $region34: #{tpu_custom_call.1} parent=27 // pred_check_branch
          %132 = sbr.rel (%p130) target = $region36
        $region35: #{tpu_custom_call.1} parent=27 // pred_region
          %133 = dma.done [#allocation5], 128
        $region36: #{tpu_custom_call.1} parent=27 // pred_fallthru
          _
        %p134 = pneg %p31
        %p135 = pneg %p28
        %p136 = pneg %p52
        %p137 = pneg %p49
        %p138 = pneg %p78
        %p139 = pneg %p75
        %p140 = scmp.lt.s32.totalorder %s15, 1
        %s141 = scalar_select %p140, %s15, 1
        %s142 = scalar_lea.vmem %s2, %s141
        %p143 = scmp.lt.s32.totalorder %s15, 1
        %s144 = scalar_select %p143, %s15, 1
        %s145 = scalar_lea.vmem %s2, %s144
        %v146 = vld [vmem:[#allocation2] sm:$0xff]
        %v147 = vld [vmem:[#allocation4] sm:$0xff]
        %v148 = vmul.f32 %v146, %v146
        %vm149 = vcmask 261120
        %v150 = vsel %vm149, %v148, 0.0
        %151 = vadd.xlane.f32.xlu0 %v150
        %v152 = vpop.xlane.xlu0 %151
        %v153 = vmax.f32 %v152, 1e-16
        %v154 = vrsqrt.pop %v153
        %v155 = vmul.f32 %v146, %v154
        %v156 = vmul.f32 %v147, %v147
        %v157 = vsel %vm149, %v156, 0.0
        %158 = vadd.xlane.f32.xlu0 %v157
        %v159 = vpop.xlane.xlu0 %158
        %v160 = vmax.f32 %v159, 1e-16
        %v161 = vrsqrt.pop %v160
        %v162 = vmul.f32 %v147, %v161
        %p163 = scmp.eq.s32.totalorder %s15, 0
        %s164 = scalar_select %p163, 1, 0
        %v165 = vstv %s164
        %vm166 = vcmp.eq.s32.totalorder %v165, 1
        %v167 = vsel %vm166, %v155, %v162
        %v168 = vsel %vm166, %v162, %v155
        %v169 = vmul.f32 %v167, 2.0
        %v171 = vsel %vm149, %v167, 0
        %v174 = vsel %vm149, %v169, 0
        %176 = vmatprep.subr.mxu0 0.0
        %177 = vmatpush1.xpose.msra.mxu0 %v174
        %178 = vmatprep.subr.mxu0 0.0
        %179 = vmatpush1.xpose.msra.mxu0 0.0
        %180 = vmatprep.subr.mxu0 0.0
        %181 = vmatpush1.xpose.msra.mxu0 0.0
        %182 = vmatprep.subr.mxu0 0.0
        %183 = vmatpush1.xpose.msra.mxu0 0.0
        %184 = vmatprep.subr.mxu0 0.0
        %185 = vmatpush1.xpose.msra.mxu0 0.0
        %186 = vmatprep.subr.mxu0 0.0
        %187 = vmatpush1.xpose.msra.mxu0 0.0
        %188 = vmatprep.subr.mxu0 0.0
        %189 = vmatpush1.xpose.msra.mxu0 0.0
        %190 = vmatprep.subr.mxu0 0.0
        %191 = vmatpush1.xpose.msra.mxu0 0.0
        %192 = vmatprep.subr.mxu0 0.0
        %193 = vmatpush1.xpose.msra.mxu0 0.0
        %194 = vmatprep.subr.mxu0 0.0
        %195 = vmatpush1.xpose.msra.mxu0 0.0
        %196 = vmatprep.subr.mxu0 0.0
        %197 = vmatpush1.xpose.msra.mxu0 0.0
        %198 = vmatprep.subr.mxu0 0.0
        %199 = vmatpush1.xpose.msra.mxu0 0.0
        %200 = vmatprep.subr.mxu0 0.0
        %201 = vmatpush1.xpose.msra.mxu0 0.0
        %202 = vmatprep.subr.mxu0 0.0
        %203 = vmatpush1.xpose.msra.mxu0 0.0
        %204 = vmatprep.subr.mxu0 0.0
        %205 = vmatpush1.xpose.msra.mxu0 0.0
        %206 = vmatprep.subr.mxu0 0.0
        %207 = vmatpush1.xpose.msra.mxu0 0.0
        %208 = vmatprep.subr.mxu0 0.0
        %209 = vmatpush1.xpose.msra.mxu0 0.0
        %210 = vmatprep.subr.mxu0 0.0
        %211 = vmatpush1.xpose.msra.mxu0 0.0
        %212 = vmatprep.subr.mxu0 0.0
        %213 = vmatpush1.xpose.msra.mxu0 0.0
        %214 = vmatprep.subr.mxu0 0.0
        %215 = vmatpush1.xpose.msra.mxu0 0.0
        %216 = vmatprep.subr.mxu0 0.0
        %217 = vmatpush1.xpose.msra.mxu0 0.0
        %218 = vmatprep.subr.mxu0 0.0
        %219 = vmatpush1.xpose.msra.mxu0 0.0
        %220 = vmatprep.subr.mxu0 0.0
        %221 = vmatpush1.xpose.msra.mxu0 0.0
        %222 = vmatprep.subr.mxu0 0.0
        %223 = vmatpush1.xpose.msra.mxu0 0.0
        %224 = vmatprep.subr.mxu0 0.0
        %225 = vmatpush1.xpose.msra.mxu0 0.0
        %226 = vmatprep.subr.mxu0 0.0
        %227 = vmatpush1.xpose.msra.mxu0 0.0
        %228 = vmatprep.subr.mxu0 0.0
        %229 = vmatpush1.xpose.msra.mxu0 0.0
        %230 = vmatprep.subr.mxu0 0.0
        %231 = vmatpush1.xpose.msra.mxu0 0.0
        %232 = vmatprep.subr.mxu0 0.0
        %233 = vmatpush1.xpose.msra.mxu0 0.0
        %234 = vmatprep.subr.mxu0 0.0
        %235 = vmatpush1.xpose.msra.mxu0 0.0
        %236 = vmatprep.subr.mxu0 0.0
        %237 = vmatpush1.xpose.msra.mxu0 0.0
        %238 = vmatprep.subr.mxu0 0.0
        %239 = vmatpush1.xpose.msra.mxu0 0.0
        %240 = vmatprep.mubr.f32.mxu0 0.0
        %241 = vmatmul.mubr.f32.gmra.mrb[0].mxu0 %v171
        %v242 = vpop.f32.mrb[0].mxu0
        %v243 = vadd.f32 0.0, %v242
        %v244 = vpop.f32.mrb[0].mxu0
        %245 = vdwg.mxu0
        %v247 = vsel %vm149, %v168, 0
        %249 = vmatprep.subr.mxu0 0.0
        %250 = vmatpush1.xpose.msra.mxu0 %v174
        %251 = vmatprep.subr.mxu0 0.0
        %252 = vmatpush1.xpose.msra.mxu0 0.0
        %253 = vmatprep.subr.mxu0 0.0
        %254 = vmatpush1.xpose.msra.mxu0 0.0
        %255 = vmatprep.subr.mxu0 0.0
        %256 = vmatpush1.xpose.msra.mxu0 0.0
        %257 = vmatprep.subr.mxu0 0.0
        %258 = vmatpush1.xpose.msra.mxu0 0.0
        %259 = vmatprep.subr.mxu0 0.0
        %260 = vmatpush1.xpose.msra.mxu0 0.0
        %261 = vmatprep.subr.mxu0 0.0
        %262 = vmatpush1.xpose.msra.mxu0 0.0
        %263 = vmatprep.subr.mxu0 0.0
        %264 = vmatpush1.xpose.msra.mxu0 0.0
        %265 = vmatprep.subr.mxu0 0.0
        %266 = vmatpush1.xpose.msra.mxu0 0.0
        %267 = vmatprep.subr.mxu0 0.0
        %268 = vmatpush1.xpose.msra.mxu0 0.0
        %269 = vmatprep.subr.mxu0 0.0
        %270 = vmatpush1.xpose.msra.mxu0 0.0
        %271 = vmatprep.subr.mxu0 0.0
        %272 = vmatpush1.xpose.msra.mxu0 0.0
        %273 = vmatprep.subr.mxu0 0.0
        %274 = vmatpush1.xpose.msra.mxu0 0.0
        %275 = vmatprep.subr.mxu0 0.0
        %276 = vmatpush1.xpose.msra.mxu0 0.0
        %277 = vmatprep.subr.mxu0 0.0
        %278 = vmatpush1.xpose.msra.mxu0 0.0
        %279 = vmatprep.subr.mxu0 0.0
        %280 = vmatpush1.xpose.msra.mxu0 0.0
        %281 = vmatprep.subr.mxu0 0.0
        %282 = vmatpush1.xpose.msra.mxu0 0.0
        %283 = vmatprep.subr.mxu0 0.0
        %284 = vmatpush1.xpose.msra.mxu0 0.0
        %285 = vmatprep.subr.mxu0 0.0
        %286 = vmatpush1.xpose.msra.mxu0 0.0
        %287 = vmatprep.subr.mxu0 0.0
        %288 = vmatpush1.xpose.msra.mxu0 0.0
        %289 = vmatprep.subr.mxu0 0.0
        %290 = vmatpush1.xpose.msra.mxu0 0.0
        %291 = vmatprep.subr.mxu0 0.0
        %292 = vmatpush1.xpose.msra.mxu0 0.0
        %293 = vmatprep.subr.mxu0 0.0
        %294 = vmatpush1.xpose.msra.mxu0 0.0
        %295 = vmatprep.subr.mxu0 0.0
        %296 = vmatpush1.xpose.msra.mxu0 0.0
        %297 = vmatprep.subr.mxu0 0.0
        %298 = vmatpush1.xpose.msra.mxu0 0.0
        %299 = vmatprep.subr.mxu0 0.0
        %300 = vmatpush1.xpose.msra.mxu0 0.0
        %301 = vmatprep.subr.mxu0 0.0
        %302 = vmatpush1.xpose.msra.mxu0 0.0
        %303 = vmatprep.subr.mxu0 0.0
        %304 = vmatpush1.xpose.msra.mxu0 0.0
        %305 = vmatprep.subr.mxu0 0.0
        %306 = vmatpush1.xpose.msra.mxu0 0.0
        %307 = vmatprep.subr.mxu0 0.0
        %308 = vmatpush1.xpose.msra.mxu0 0.0
        %309 = vmatprep.subr.mxu0 0.0
        %310 = vmatpush1.xpose.msra.mxu0 0.0
        %311 = vmatprep.subr.mxu0 0.0
        %312 = vmatpush1.xpose.msra.mxu0 0.0
        %313 = vmatprep.mubr.f32.mxu0 0.0
        %314 = vmatmul.mubr.f32.gmra.mrb[0].mxu0 %v247
        %v315 = vpop.f32.mrb[0].mxu0
        %v316 = vadd.f32 0.0, %v315
        %v317 = vpop.f32.mrb[0].mxu0
        %318 = vdwg.mxu0
        %v319 = vsub.f32 %v243, 2.0
        %v320 = vmul.f32 %v319, 1.442695
        %v321 = vpow.pop %v320
        %v322 = vsub.f32 %v316, 2.0
        %v323 = vmul.f32 %v322, 1.442695
        %v324 = vpow.pop %v323
        %vm325 = vcmask 64512
        %v326 = vsel %vm325, %v321, 0.0
        %v327 = vrot.slane %v326, 4
        %v328 = vadd.f32 %v326, %v327
        %v329 = vrot.slane %v328, 2
        %v330 = vadd.f32 %v328, %v329
        %v331 = vrot.slane %v330, 1
        %v332 = vadd.f32 %v330, %v331
        %v333 = vsel %vm325, %v324, 0.0
        %v334 = vrot.slane %v333, 4
        %v335 = vadd.f32 %v333, %v334
        %v336 = vrot.slane %v335, 2
        %v337 = vadd.f32 %v335, %v336
        %v338 = vrot.slane %v337, 1
        %v339 = vadd.f32 %v337, %v338
        %v340 = vadd.f32 %v332, %v339
        %v341 = vmul.f32 %v167, %v169
        %v343 = vsel %vm149, 1.0, 0
        %v346 = vsel %vm149, %v341, 0
        %348 = vmatprep.subr.mxu0 0.0
        %349 = vmatpush1.xpose.msra.mxu0 %v346
        %350 = vmatprep.subr.mxu0 0.0
        %351 = vmatpush1.xpose.msra.mxu0 0.0
        %352 = vmatprep.subr.mxu0 0.0
        %353 = vmatpush1.xpose.msra.mxu0 0.0
        %354 = vmatprep.subr.mxu0 0.0
        %355 = vmatpush1.xpose.msra.mxu0 0.0
        %356 = vmatprep.subr.mxu0 0.0
        %357 = vmatpush1.xpose.msra.mxu0 0.0
        %358 = vmatprep.subr.mxu0 0.0
        %359 = vmatpush1.xpose.msra.mxu0 0.0
        %360 = vmatprep.subr.mxu0 0.0
        %361 = vmatpush1.xpose.msra.mxu0 0.0
        %362 = vmatprep.subr.mxu0 0.0
        %363 = vmatpush1.xpose.msra.mxu0 0.0
        %364 = vmatprep.subr.mxu0 0.0
        %365 = vmatpush1.xpose.msra.mxu0 0.0
        %366 = vmatprep.subr.mxu0 0.0
        %367 = vmatpush1.xpose.msra.mxu0 0.0
        %368 = vmatprep.subr.mxu0 0.0
        %369 = vmatpush1.xpose.msra.mxu0 0.0
        %370 = vmatprep.subr.mxu0 0.0
        %371 = vmatpush1.xpose.msra.mxu0 0.0
        %372 = vmatprep.subr.mxu0 0.0
        %373 = vmatpush1.xpose.msra.mxu0 0.0
        %374 = vmatprep.subr.mxu0 0.0
        %375 = vmatpush1.xpose.msra.mxu0 0.0
        %376 = vmatprep.subr.mxu0 0.0
        %377 = vmatpush1.xpose.msra.mxu0 0.0
        %378 = vmatprep.subr.mxu0 0.0
        %379 = vmatpush1.xpose.msra.mxu0 0.0
        %380 = vmatprep.subr.mxu0 0.0
        %381 = vmatpush1.xpose.msra.mxu0 0.0
        %382 = vmatprep.subr.mxu0 0.0
        %383 = vmatpush1.xpose.msra.mxu0 0.0
        %384 = vmatprep.subr.mxu0 0.0
        %385 = vmatpush1.xpose.msra.mxu0 0.0
        %386 = vmatprep.subr.mxu0 0.0
        %387 = vmatpush1.xpose.msra.mxu0 0.0
        %388 = vmatprep.subr.mxu0 0.0
        %389 = vmatpush1.xpose.msra.mxu0 0.0
        %390 = vmatprep.subr.mxu0 0.0
        %391 = vmatpush1.xpose.msra.mxu0 0.0
        %392 = vmatprep.subr.mxu0 0.0
        %393 = vmatpush1.xpose.msra.mxu0 0.0
        %394 = vmatprep.subr.mxu0 0.0
        %395 = vmatpush1.xpose.msra.mxu0 0.0
        %396 = vmatprep.subr.mxu0 0.0
        %397 = vmatpush1.xpose.msra.mxu0 0.0
        %398 = vmatprep.subr.mxu0 0.0
        %399 = vmatpush1.xpose.msra.mxu0 0.0
        %400 = vmatprep.subr.mxu0 0.0
        %401 = vmatpush1.xpose.msra.mxu0 0.0
        %402 = vmatprep.subr.mxu0 0.0
        %403 = vmatpush1.xpose.msra.mxu0 0.0
        %404 = vmatprep.subr.mxu0 0.0
        %405 = vmatpush1.xpose.msra.mxu0 0.0
        %406 = vmatprep.subr.mxu0 0.0
        %407 = vmatpush1.xpose.msra.mxu0 0.0
        %408 = vmatprep.subr.mxu0 0.0
        %409 = vmatpush1.xpose.msra.mxu0 0.0
        %410 = vmatprep.subr.mxu0 0.0
        %411 = vmatpush1.xpose.msra.mxu0 0.0
        %412 = vmatprep.mubr.f32.mxu0 0.0
        %413 = vmatmul.mubr.f32.gmra.mrb[0].mxu0 %v343
        %v414 = vpop.f32.mrb[0].mxu0
        %v415 = vadd.f32 0.0, %v414
        %v416 = vpop.f32.mrb[0].mxu0
        %417 = vdwg.mxu0
        %v418 = vsub.f32 %v415, 2.0
        %v419 = vmul.f32 %v418, 1.442695
        %v420 = vpow.pop %v419
        %v421 = vsub.f32 %v340, %v420
        %v422 = vmax.f32 %v421, 1e-30
        %v423 = vlog2.pop %v422
        %v424 = vmul.f32 %v423, 0.6931472
        %v425 = vadd.f32 %v424, 2.0
        %v426 = vmul.f32 %v167, %v168
        %v427 = vsel %vm149, %v426, 0.0
        %428 = vadd.xlane.f32.xlu0 %v427
        %v429 = vpop.xlane.xlu0 %428
        %v430 = vrot.slane %v429, 4
        %v431 = vadd.f32 %v429, %v430
        %v432 = vrot.slane %v431, 2
        %v433 = vadd.f32 %v431, %v432
        %v434 = vrot.slane %v433, 1
        %v435 = vadd.f32 %v433, %v434
        %v436 = vmul.f32 %v435, 2.0
        %vm437 = vcmask 57344
        %v438 = vsel %vm437, %v425, 0.0
        %439 = vadd.xlane.f32.xlu0 %v438
        %v440 = vpop.xlane.xlu0 %439
        %v441 = vsub.f32 %v440, %v436
        %vm442 = vcmask 0
        %443 = vst.msk [vmem:[%s145] sm:$0x1] %vm442, %v441
        %p444 = scmp.lt.s32.totalorder %s15, 1
        %s445 = scalar_select %p444, %s15, 1
        %s446 = scalar_lea.vmem %s2, %s445
        // Predicated region
        $region37: #{tpu_custom_call.1} parent=27 // pred_check
          %p447 = pneg %p75
        $region38: #{tpu_custom_call.1} parent=27 // pred_check_branch
          %449 = sbr.rel (%p447) target = $region40
        $region39: #{tpu_custom_call.1} parent=27 // pred_region
          _
        $region40: #{tpu_custom_call.1} parent=27 // pred_fallthru
          _
      $region28: #{tpu_custom_call.1} parent=5 // pred_fallthru
        _
      %p450 = scmp.le.s32.totalorder 2, %s10
      // Predicated region
      $region41: #{tpu_custom_call.1} parent=5 // pred_check
        %p451 = pneg %p450
      $region42: #{tpu_custom_call.1} parent=5 // pred_check_branch
        %453 = sbr.rel (%p451) target = $region44
      $region43: #{tpu_custom_call.1} parent=5 // pred_region
        %s454 = ssub.s32 %s10, 2
        // Predicated region
        $region45: #{tpu_custom_call.1} parent=43 // pred_check
          %p455 = pneg %p81
        $region46: #{tpu_custom_call.1} parent=43 // pred_check_branch
          %457 = sbr.rel (%p455) target = $region48
        $region47: #{tpu_custom_call.1} parent=43 // pred_region
          %p458 = scmp.lt.s32.totalorder %s16, 1
          %s459 = scalar_select %p458, %s16, 1
          %s460 = scalar_lea.vmem %s2, %s459
        $region48: #{tpu_custom_call.1} parent=43 // pred_fallthru
          _
      $region44: #{tpu_custom_call.1} parent=5 // pred_fallthru
        _
    $region6: #{tpu_custom_call.1} parent=1 // loop_footer
      %s14 = sadd.s32 1, %s10
    $region7: #{tpu_custom_call.1} parent=1 // loop_footer_branch
      %9 = sbr.rel target = $region3
    $region8: #{tpu_custom_call.1} parent=1 // loop_exit
      _
    %461 = vsyncpa [#allocation3], 1
    %s462 = scalar_lea.sflag [#allocation3], 1
    %463 = vsyncpa %s462, 1
    %464 = vsyncpa [#allocation5], 1

</llo_original>
